<compile_context>
chip_gen: v5e
topology: v5e:2x2
jax: 0.10.0
libtpu: 0.0.40
codegen_flags: <defaults>
</compile_context>

<pallas_src>
import jax
import jax.numpy as jnp
import numpy as np
from jax.experimental import pallas as pl
from jax.experimental.pallas import tpu as pltpu

_LANES = 128


# ----------------------------------------------------------------------------
# Primary path: zero-copy identity (aliased output, empty body, no DMA).
# ----------------------------------------------------------------------------
def _identity_alias_kernel(x_ref, o_ref):
    # Output buffer aliases the input buffer; there is nothing to move.
    del x_ref, o_ref


def pallas_identity(x):
    """Identity.forward(x) == x with zero data movement (aliased output)."""
    if x.size == 0:
        return x
    return pl.pallas_call(
        _identity_alias_kernel,
        out_shape=jax.ShapeDtypeStruct(x.shape, x.dtype),
        in_specs=[pl.BlockSpec(memory_space=pl.ANY)],
        out_specs=pl.BlockSpec(memory_space=pl.ANY),
        input_output_aliases={0: 0},
    )(x)


# ----------------------------------------------------------------------------
# Secondary path: materialized copy (only if a fresh buffer is really wanted).
# ----------------------------------------------------------------------------
def _identity_copy_kernel(x_ref, o_ref):
    # Whole-tile load + whole-tile store; both are lane-dense (last dim = 128).
    o_ref[...] = x_ref[...]


def _round_up(a, b):
    return ((a + b - 1) // b) * b


def pallas_identity_copy(x, *, max_tile_rows=2048):
    """Identity.forward(x) values in a freshly materialized buffer."""
    orig_shape = x.shape
    total = x.size
    if total == 0:
        return x

    # Sublane granularity by element width: f32 -> 8, bf16 -> 16, int8 -> 32.
    itemsize = jnp.dtype(x.dtype).itemsize
    sublanes = max(8, 32 // max(itemsize, 1))

    flat = x.reshape(-1)                      # contiguous view (bitcast reshape)
    rows_main = total // _LANES               # 128-aligned prefix rows
    tail = total - rows_main * _LANES         # <128 leftover elements

    pieces = []
    if rows_main > 0:
        x2 = flat[: rows_main * _LANES].reshape(rows_main, _LANES)
        tm = min(max_tile_rows, _round_up(rows_main, sublanes))
        grid = (pl.cdiv(rows_main, tm),)      # partial last block masked by Pallas
        out2 = pl.pallas_call(
            _identity_copy_kernel,
            out_shape=jax.ShapeDtypeStruct((rows_main, _LANES), x.dtype),
            grid=grid,
            in_specs=[pl.BlockSpec((tm, _LANES), lambda i: (i, 0))],
            out_specs=pl.BlockSpec((tm, _LANES), lambda i: (i, 0)),
            compiler_params=pltpu.CompilerParams(
                dimension_semantics=("parallel",)),
        )(x2)
        pieces.append(out2.reshape(-1))
    if tail > 0:
        # Tiny lane tail: patched directly (identity), no full-array padding pass.
        pieces.append(flat[rows_main * _LANES:])

    out_flat = pieces[0] if len(pieces) == 1 else jnp.concatenate(pieces)
    return out_flat.reshape(orig_shape)


if __name__ == "__main__":
    key = jax.random.PRNGKey(0)

    # Primary case: the module's input shape from the surrounding DLA code path.
    x = jax.random.normal(key, (2, 4, 16, 16), jnp.float32)
    y = jax.block_until_ready(pallas_identity(x))
    np.testing.assert_array_equal(np.asarray(y), np.asarray(x))

    # Materialized-copy variant: multi-tile aligned, partial-block + lane tail,
    # and tail-only shapes.
    for shape in [(4, 1024, 128), (2, 333), (3, 5, 7)]:
        key, subkey = jax.random.split(key)
        xi = jax.random.normal(subkey, shape, jnp.float32)
        yi = jax.block_until_ready(pallas_identity_copy(xi))
        np.testing.assert_array_equal(np.asarray(yi), np.asarray(xi))

    print("KERNEL_OK")
</pallas_src>

<mosaic_0001>
module attributes {stable_mosaic.version = 11 : i64} {
  func.func @_identity_alias_kernel(%arg0: memref<2x4x16x16xf32, #tpu.memory_space<any>>, %arg1: memref<2x4x16x16xf32, #tpu.memory_space<any>>) attributes {dimension_semantics = [], scalar_prefetch = 0 : i64, scratch_operands = 0 : i64, tpu.core_type = #tpu.core_type<tc>} {
    return
  }
}

</mosaic_0001>

<llo_original>
// kernel: tpu_custom_call.1
$region0: #{tpu_custom_call.1}
  #allocation0 [shape = 'u32[]', space=smem, size = 0x4, offset = 0x4, fixed_abs, tag = 'smem constant byte address 0x4 - core index']
  #allocation1 [shape = 'u32[72,128]{1,0:T(1,128)}', space=vmem, size = 0x9000, scoped, tag = 'internal scratch']
  %s0 = inlined_call_operand.hbm [shape: f32[2,4,16,16], index: 0, kind: input, shape index: {}, may-alias: {0,1}]
  %s1 = inlined_call_operand.hbm [shape: f32[2,4,16,16], index: 1, kind: output, shape index: {}, may-alias: {0,1}]
  %s2 = sld [smem:[#allocation0]]
  $region2: #{tpu_custom_call.1} parent=0
    _
  %s4 = ssub.s32 1, %s2
  %s5 = scalar_select 0, %s4, %s2

</llo_original>
